<compile_context>
chip_gen: v7x
topology: tpu7x:2x2x1
jax: 0.10.0
libtpu: 0.0.40
codegen_flags: <defaults>
</compile_context>

<pallas_src>
import jax
import jax.numpy as jnp
from jax.experimental import pallas as pl
from jax.experimental.pallas import tpu as pltpu

_MIN_GRID_STEPS = 4  # keep >= this many grid steps when the problem allows


def _nlinear_kernel(x_ref, w_ref, b_ref, coef_ref, o_ref):
    # x_ref:    (L, T)  lookback x lane tile (lanes = channels or batch*channels)
    # w_ref:    (P, L)  full weight; constant index_map -> resident across steps
    # b_ref:    (P, 1)  bias, pre-shaped so it broadcasts along lanes
    # coef_ref: (P, 1)  1 - rowsum(W)  (seq_last hoisted through the matmul)
    # o_ref:    (P, T)
    x = x_ref[...]
    seq_last = x[-1:, :]                                               # (1, T)
    out = jnp.dot(w_ref[...], x, preferred_element_type=jnp.float32)   # MXU
    out = out + b_ref[...] + coef_ref[...] * seq_last                  # VPU broadcasts
    o_ref[...] = out.astype(o_ref.dtype)


def _vmem_budget_bytes():
    """Generation-aware VMEM budget: 3/4 of physical VMEM (leave compiler headroom)."""
    try:
        cap = int(pltpu.get_tpu_info().vmem_capacity_bytes)
    except Exception:
        cap = 64 * 1024 * 1024  # conservative fallback = v7x per-TC physical VMEM
    return (cap // 4) * 3       # ~96 MiB on v5e/v6e (128 MiB), ~48 MiB on v7x (64 MiB)


def _lane_tile_budget(L, P, itemsize, budget_bytes):
    """Largest lane-tile width (multiple of 128) that fits the VMEM budget."""
    # Constant blocks (weight + bias + coef); counted double-buffered (pipeline default).
    fixed = 2 * (P * L + 2 * P) * itemsize
    # Per lane: double-buffered x / out columns + in-kernel f32 temporaries
    # (dot accumulator and broadcast adds).
    per_lane = 2 * (L + P) * itemsize + (L + 3 * P) * 4
    avail = max(budget_bytes - fixed, 0)
    return max(128, (avail // per_lane) // 128 * 128)


def nlinear_forward(x, weight, bias):
    """x: [B, L, C], weight: [P, L], bias: [P]  ->  y: [B, P, C]."""
    B, L, C = x.shape
    P = weight.shape[0]
    dtype = x.dtype
    itemsize = jnp.dtype(dtype).itemsize

    weight = weight.astype(dtype)
    bias2 = bias.astype(dtype).reshape(P, 1)
    # seq_last hoist: W @ (x - s) + b + s  ==  W @ x + b + coef * s
    coef2 = (1.0 - jnp.sum(weight.astype(jnp.float32), axis=1)).astype(dtype).reshape(P, 1)

    budget = _vmem_budget_bytes()
    tile_budget = _lane_tile_budget(L, P, itemsize, budget)

    if C >= 128:
        # ---- native path: x stays [B, L, C]; zero HBM reshuffle in the wrapper ----
        tc_dim_cap = (C // 128) * 128                 # <= C, multiple of 128
        c_blocks_needed = -(-_MIN_GRID_STEPS // B)    # ceil(_MIN_GRID_STEPS / B)
        tc_steps_cap = max(128, (C // c_blocks_needed) // 128 * 128)
        TC = max(128, min(tile_budget, tc_steps_cap, tc_dim_cap))
        grid = (B, pl.cdiv(C, TC))
        # Partial last C-block is safe: lanes are independent (matmul contracts
        # over L only), and out-of-bounds output lanes are discarded.
        return pl.pallas_call(
            _nlinear_kernel,
            out_shape=jax.ShapeDtypeStruct((B, P, C), dtype),
            grid_spec=pltpu.PrefetchScalarGridSpec(
                num_scalar_prefetch=0,
                grid=grid,
                in_specs=[
                    pl.BlockSpec((None, L, TC), lambda b, j: (b, 0, j)),  # x tile
                    pl.BlockSpec((P, L), lambda b, j: (0, 0)),            # weight
                    pl.BlockSpec((P, 1), lambda b, j: (0, 0)),            # bias
                    pl.BlockSpec((P, 1), lambda b, j: (0, 0)),            # coef
                ],
                out_specs=pl.BlockSpec((None, P, TC), lambda b, j: (b, 0, j)),
            ),
            compiler_params=pltpu.CompilerParams(
                dimension_semantics=("parallel", "parallel"),
                vmem_limit_bytes=budget,
            ),
        )(x, weight, bias2, coef2)

    # ---- fold path (small C): fold batch into lanes so tiles stay lane dense ----
    N = B * C
    x2 = jnp.transpose(x, (1, 0, 2)).reshape(L, N)    # [L, B*C]
    if N < 128:
        # Tiny problem: pad lanes to one 128-wide tile (array is tiny, pad is cheap).
        N_pad, TN = 128, 128
        x2 = jnp.pad(x2, ((0, 0), (0, N_pad - N)))
        grid = (1,)
    else:
        N_pad = N
        tn_steps_cap = max(128, (N // _MIN_GRID_STEPS) // 128 * 128)
        TN = max(128, min(tile_budget, tn_steps_cap))
        grid = (pl.cdiv(N, TN),)                      # partial last block is fine (see above)

    out2 = pl.pallas_call(
        _nlinear_kernel,
        out_shape=jax.ShapeDtypeStruct((P, N_pad), dtype),
        grid_spec=pltpu.PrefetchScalarGridSpec(
            num_scalar_prefetch=0,
            grid=grid,
            in_specs=[
                pl.BlockSpec((L, TN), lambda j: (0, j)),   # x lane tile
                pl.BlockSpec((P, L), lambda j: (0, 0)),    # weight
                pl.BlockSpec((P, 1), lambda j: (0, 0)),    # bias
                pl.BlockSpec((P, 1), lambda j: (0, 0)),    # coef
            ],
            out_specs=pl.BlockSpec((P, TN), lambda j: (0, j)),
        ),
        compiler_params=pltpu.CompilerParams(
            dimension_semantics=("parallel",),
            vmem_limit_bytes=budget,
        ),
    )(x2, weight, bias2, coef2)

    # [P, N(_pad)] -> [B, P, C]
    return jnp.transpose(out2[:, :N].reshape(P, B, C), (1, 0, 2))


def nlinear_reference(x, weight, bias):
    seq_last = x[:, -1:, :]
    y = jnp.einsum("blc,pl->bpc", x - seq_last, weight,
                   precision=jax.lax.Precision.HIGHEST)
    return y + bias[None, :, None] + seq_last


def _run_case(key, B, L, C, P):
    kx, kw, kb = jax.random.split(key, 3)
    x = jax.random.normal(kx, (B, L, C), dtype=jnp.float32)
    # Deterministic nn.Linear-style init: U(-1/sqrt(L), 1/sqrt(L))
    bound = 1.0 / (L ** 0.5)
    weight = jax.random.uniform(kw, (P, L), minval=-bound, maxval=bound,
                                dtype=jnp.float32)
    bias = jax.random.uniform(kb, (P,), minval=-bound, maxval=bound,
                              dtype=jnp.float32)

    y = jax.block_until_ready(jax.jit(nlinear_forward)(x, weight, bias))
    y_ref = nlinear_reference(x, weight, bias)
    assert y.shape == (B, P, C)
    assert jnp.allclose(y, y_ref, atol=1e-5, rtol=1e-5), \
        float(jnp.max(jnp.abs(y - y_ref)))


if __name__ == "__main__":
    key = jax.random.PRNGKey(0)
    k1, k2 = jax.random.split(key)
    # Fold path: tiny channel count -> batch folded into the lane axis.
    _run_case(k1, B=2, L=8, C=4, P=16)
    # Native [B, L, C] path: C >= 128 -> no transpose/reshape/pad round-trips.
    _run_case(k2, B=2, L=8, C=128, P=16)
    print("KERNEL_OK")
</pallas_src>

<mosaic_0001>
module attributes {stable_mosaic.version = 11 : i64} {
  func.func @_nlinear_kernel(%arg0: i32, %arg1: memref<8x128xf32, #tpu.memory_space<vmem>>, %arg2: memref<16x8xf32, #tpu.memory_space<vmem>>, %arg3: memref<16x1xf32, #tpu.memory_space<vmem>>, %arg4: memref<16x1xf32, #tpu.memory_space<vmem>>, %arg5: memref<16x128xf32, #tpu.memory_space<vmem>>) attributes {dimension_semantics = [#tpu.dimension_semantics<parallel>], iteration_bounds = array<i64: 1>, scalar_prefetch = 0 : i64, scratch_operands = 0 : i64, tpu.core_type = #tpu.core_type<tc>, window_params = [{transform_indices = @transform_0, window_bounds = array<i64: 8, 128>}, {pipeline_mode = #tpu.pipeline_mode<synchronous>, transform_indices = @transform_1, window_bounds = array<i64: 16, 8>}, {pipeline_mode = #tpu.pipeline_mode<synchronous>, transform_indices = @transform_2, window_bounds = array<i64: 16, 1>}, {pipeline_mode = #tpu.pipeline_mode<synchronous>, transform_indices = @transform_3, window_bounds = array<i64: 16, 1>}, {transform_indices = @transform_4, window_bounds = array<i64: 16, 128>}]} {
    %c0 = arith.constant 0 : index
    %c0_0 = arith.constant 0 : index
    %0 = vector.load %arg1[%c0, %c0_0] : memref<8x128xf32, #tpu.memory_space<vmem>>, vector<8x128xf32>
    %1 = vector.extract_strided_slice %0 {offsets = [7, 0], sizes = [1, 128], strides = [1, 1]} : vector<8x128xf32> to vector<1x128xf32>
    %c0_1 = arith.constant 0 : index
    %c0_2 = arith.constant 0 : index
    %2 = vector.load %arg2[%c0_1, %c0_2] : memref<16x8xf32, #tpu.memory_space<vmem>>, vector<16x8xf32>
    %cst = arith.constant dense<0.000000e+00> : vector<16x128xf32>
    %3 = tpu.matmul %2, %0, %cst {dimension_numbers = #tpu.dot_dimension_numbers<[1], [0], [0], [1], [0, 0, 1, 1], [], []>} : vector<16x8xf32>, vector<8x128xf32>, vector<16x128xf32> -> vector<16x128xf32>
    %c0_3 = arith.constant 0 : index
    %c0_4 = arith.constant 0 : index
    %4 = vector.load %arg3[%c0_3, %c0_4] : memref<16x1xf32, #tpu.memory_space<vmem>>, vector<16x1xf32>
    %5 = vector.broadcast %4 : vector<16x1xf32> to vector<16x128xf32>
    %6 = arith.addf %3, %5 : vector<16x128xf32>
    %c0_5 = arith.constant 0 : index
    %c0_6 = arith.constant 0 : index
    %7 = vector.load %arg4[%c0_5, %c0_6] : memref<16x1xf32, #tpu.memory_space<vmem>>, vector<16x1xf32>
    %8 = vector.broadcast %7 : vector<16x1xf32> to vector<16x128xf32>
    %9 = vector.broadcast %1 : vector<1x128xf32> to vector<16x128xf32>
    %10 = arith.mulf %8, %9 : vector<16x128xf32>
    %11 = arith.addf %6, %10 : vector<16x128xf32>
    %c0_7 = arith.constant 0 : index
    %c0_8 = arith.constant 0 : index
    %12 = vector.load %arg5[%c0_7, %c0_8] : memref<16x128xf32, #tpu.memory_space<vmem>>, vector<16x128xf32>
    tpu.vector_store %arg5[%c0_7, %c0_8], %11 {strides = array<i32>} : memref<16x128xf32, #tpu.memory_space<vmem>>, vector<16x128xf32>,
    return
  }
  func.func @transform_0(%arg0: i32) -> (i32, i32) {
    %c0_i32 = arith.constant 0 : i32
    %c0_i32_0 = arith.constant 0 : i32
    return %c0_i32, %arg0 : i32, i32
  }
  func.func @transform_1(%arg0: i32) -> (i32, i32) {
    %c0_i32 = arith.constant 0 : i32
    %c0_i32_0 = arith.constant 0 : i32
    %c0_i32_1 = arith.constant 0 : i32
    return %c0_i32, %c0_i32_0 : i32, i32
  }
  func.func @transform_2(%arg0: i32) -> (i32, i32) {
    %c0_i32 = arith.constant 0 : i32
    %c0_i32_0 = arith.constant 0 : i32
    %c0_i32_1 = arith.constant 0 : i32
    return %c0_i32, %c0_i32_0 : i32, i32
  }
  func.func @transform_3(%arg0: i32) -> (i32, i32) {
    %c0_i32 = arith.constant 0 : i32
    %c0_i32_0 = arith.constant 0 : i32
    %c0_i32_1 = arith.constant 0 : i32
    return %c0_i32, %c0_i32_0 : i32, i32
  }
  func.func @transform_4(%arg0: i32) -> (i32, i32) {
    %c0_i32 = arith.constant 0 : i32
    %c0_i32_0 = arith.constant 0 : i32
    return %c0_i32, %arg0 : i32, i32
  }
}

</mosaic_0001>

<llo_original>
// kernel: nlinear_forward.1
$region0: #{nlinear_forward.1}
  #allocation0 [shape = 'u32[]', space=smem, size = 0x4, offset = 0x4, fixed_abs, tag = 'smem constant byte address 0x4 - core index']
  #allocation1 [shape = 'u32[144,128]{1,0:T(1,128)}', space=vmem, size = 0x12000, scoped, tag = 'internal scratch']
  %s0 = inlined_call_operand.vmem [shape: f32[8,128], index: 0, kind: input, shape index: {}]
  %s1 = inlined_call_operand.vmem [shape: f32[16,8], index: 1, kind: input, shape index: {}]
  %s2 = inlined_call_operand.vmem [shape: f32[16,1], index: 2, kind: input, shape index: {}]
  %s3 = inlined_call_operand.vmem [shape: f32[16,1], index: 3, kind: input, shape index: {}]
  %s4 = inlined_call_operand.vmem [shape: f32[16,128], index: 4, kind: output, shape index: {}]
  %s5 = sld [smem:[#allocation0]]
  $region26: #{nlinear_forward.1} parent=0
    _
  %s7 = ssub.s32 1, %s5
  %s8 = scalar_select 0, %s7, %s5
  // Predicated region
  $region2: #{nlinear_forward.1} parent=0 // pred_check
    _
  $region3: #{nlinear_forward.1} parent=0 // pred_check_branch
    %10 = sbr.rel (0) target = $region5
  $region4: #{nlinear_forward.1} parent=0 // pred_region
    _
  $region5: #{nlinear_forward.1} parent=0 // pred_fallthru
    _
  // Predicated region
  $region6: #{nlinear_forward.1} parent=0 // pred_check
    _
  $region7: #{nlinear_forward.1} parent=0 // pred_check_branch
    %12 = sbr.rel (0) target = $region9
  $region8: #{nlinear_forward.1} parent=0 // pred_region
    _
  $region9: #{nlinear_forward.1} parent=0 // pred_fallthru
    _
  // Predicated region
  $region10: #{nlinear_forward.1} parent=0 // pred_check
    _
  $region11: #{nlinear_forward.1} parent=0 // pred_check_branch
    %14 = sbr.rel (0) target = $region13
  $region12: #{nlinear_forward.1} parent=0 // pred_region
    _
  $region13: #{nlinear_forward.1} parent=0 // pred_fallthru
    _
  // Predicated region
  $region14: #{nlinear_forward.1} parent=0 // pred_check
    _
  $region15: #{nlinear_forward.1} parent=0 // pred_check_branch
    %16 = sbr.rel (0) target = $region17
  $region16: #{nlinear_forward.1} parent=0 // pred_region
    _
  $region17: #{nlinear_forward.1} parent=0 // pred_fallthru
    _
  %v17 = vld [vmem:[%s0] sm:$0xff]
  %v18 = vld [vmem:[%s1] sm:$0xff]
  %v19 = vld [vmem:[%s1 + $0x8] sm:$0xff]
  %v20 = vld [vmem:[%s2] sm:$0xff]
  %v21 = vld [vmem:[%s2 + $0x8] sm:$0xff]
  %23 = vset.pattern.permute.xlu0 0
  %24 = vperm.xlu0 %23, %v20
  %v25 = vpop.permute.xlu0 %24
  %28 = vset.pattern.permute.xlu0 0
  %29 = vperm.xlu0 %28, %v21
  %v30 = vpop.permute.xlu0 %29
  %vm32 = vcmask 64512
  %v34 = vsel %vm32, %v18, 0
  %v37 = vsel %vm32, %v19, 0
  %39 = vmatprep.subr.mxu0 0.0
  %40 = vmatpush1.msra.mxu0 %v17
  %41 = vmatprep.subr.mxu0 0.0
  %42 = vmatpush1.msra.mxu0 0.0
  %43 = vmatprep.subr.mxu0 0.0
  %44 = vmatpush1.msra.mxu0 0.0
  %45 = vmatprep.subr.mxu0 0.0
  %46 = vmatpush1.msra.mxu0 0.0
  %47 = vmatprep.subr.mxu0 0.0
  %48 = vmatpush1.msra.mxu0 0.0
  %49 = vmatprep.subr.mxu0 0.0
  %50 = vmatpush1.msra.mxu0 0.0
  %51 = vmatprep.subr.mxu0 0.0
  %52 = vmatpush1.msra.mxu0 0.0
  %53 = vmatprep.subr.mxu0 0.0
  %54 = vmatpush1.msra.mxu0 0.0
  %55 = vmatprep.subr.mxu0 0.0
  %56 = vmatpush1.msra.mxu0 0.0
  %57 = vmatprep.subr.mxu0 0.0
  %58 = vmatpush1.msra.mxu0 0.0
  %59 = vmatprep.subr.mxu0 0.0
  %60 = vmatpush1.msra.mxu0 0.0
  %61 = vmatprep.subr.mxu0 0.0
  %62 = vmatpush1.msra.mxu0 0.0
  %63 = vmatprep.subr.mxu0 0.0
  %64 = vmatpush1.msra.mxu0 0.0
  %65 = vmatprep.subr.mxu0 0.0
  %66 = vmatpush1.msra.mxu0 0.0
  %67 = vmatprep.subr.mxu0 0.0
  %68 = vmatpush1.msra.mxu0 0.0
  %69 = vmatprep.subr.mxu0 0.0
  %70 = vmatpush1.msra.mxu0 0.0
  %71 = vmatprep.subr.mxu0 0.0
  %72 = vmatpush1.msra.mxu0 0.0
  %73 = vmatprep.subr.mxu0 0.0
  %74 = vmatpush1.msra.mxu0 0.0
  %75 = vmatprep.subr.mxu0 0.0
  %76 = vmatpush1.msra.mxu0 0.0
  %77 = vmatprep.subr.mxu0 0.0
  %78 = vmatpush1.msra.mxu0 0.0
  %79 = vmatprep.subr.mxu0 0.0
  %80 = vmatpush1.msra.mxu0 0.0
  %81 = vmatprep.subr.mxu0 0.0
  %82 = vmatpush1.msra.mxu0 0.0
  %83 = vmatprep.subr.mxu0 0.0
  %84 = vmatpush1.msra.mxu0 0.0
  %85 = vmatprep.subr.mxu0 0.0
  %86 = vmatpush1.msra.mxu0 0.0
  %87 = vmatprep.subr.mxu0 0.0
  %88 = vmatpush1.msra.mxu0 0.0
  %89 = vmatprep.subr.mxu0 0.0
  %90 = vmatpush1.msra.mxu0 0.0
  %91 = vmatprep.subr.mxu0 0.0
  %92 = vmatpush1.msra.mxu0 0.0
  %93 = vmatprep.subr.mxu0 0.0
  %94 = vmatpush1.msra.mxu0 0.0
  %95 = vmatprep.subr.mxu0 0.0
  %96 = vmatpush1.msra.mxu0 0.0
  %97 = vmatprep.subr.mxu0 0.0
  %98 = vmatpush1.msra.mxu0 0.0
  %99 = vmatprep.subr.mxu0 0.0
  %100 = vmatpush1.msra.mxu0 0.0
  %101 = vmatprep.subr.mxu0 0.0
  %102 = vmatpush1.msra.mxu0 0.0
  %103 = vmatprep.mubr.f32.mxu0 0.0
  %104 = vmatmul.mubr.f32.gmra.mrb[0].mxu0 %v34
  %v105 = vpop.f32.mrb[0].mxu0
  %v106 = vadd.f32 %v25, %v105
  %v107 = vpop.f32.mrb[0].mxu0
  %108 = vmatprep.mubr.f32.mxu0 0.0
  %109 = vmatmul.mubr.f32.gmra.mrb[0].mxu0 %v37
  %v110 = vpop.f32.mrb[0].mxu0
  %v111 = vadd.f32 %v30, %v110
  %v112 = vpop.f32.mrb[0].mxu0
  %113 = vdwg.mxu0
  %v114 = vld [vmem:[%s3] sm:$0xff]
  %v115 = vld [vmem:[%s3 + $0x8] sm:$0xff]
  %117 = vset.pattern.permute.xlu0 0
  %118 = vperm.xlu0 %117, %v114
  %v119 = vpop.permute.xlu0 %118
  %122 = vset.pattern.permute.xlu0 0
  %123 = vperm.xlu0 %122, %v115
  %v124 = vpop.permute.xlu0 %123
  %v126 = vlaneseq
  %v127 = vshrl.u32 %v126, 7
  %v128 = vsub.s32 7, %v127
  %v129 = vrot.slane %v17, %v128
  %v130 = vmul.f32 %v119, %v129
  %v131 = vmul.f32 %v124, %v129
  %v132 = vadd.f32 %v106, %v130
  %v133 = vadd.f32 %v111, %v131
  %134 = vst [vmem:[%s4] sm:$0xff] %v132
  %135 = vst [vmem:[%s4 + $0x8] sm:$0xff] %v133
  // Predicated region
  $region18: #{nlinear_forward.1} parent=0 // pred_check
    _
  $region19: #{nlinear_forward.1} parent=0 // pred_check_branch
    %137 = sbr.rel (0) target = $region21
  $region20: #{nlinear_forward.1} parent=0 // pred_region
    _
  $region21: #{nlinear_forward.1} parent=0 // pred_fallthru
    _
  // Predicated region
  $region22: #{nlinear_forward.1} parent=0 // pred_check
    _
  $region23: #{nlinear_forward.1} parent=0 // pred_check_branch
    %139 = sbr.rel (0) target = $region25
  $region24: #{nlinear_forward.1} parent=0 // pred_region
    _
  $region25: #{nlinear_forward.1} parent=0 // pred_fallthru
    _

</llo_original>
